<compile_context>
chip_gen: v6e
topology: v6e:2x2x1
jax: 0.10.0
libtpu: 0.0.40
codegen_flags: <defaults>
</compile_context>

<pallas_src>
import jax
import jax.numpy as jnp
from jax.experimental import pallas as pl
from jax.experimental.pallas import tpu as pltpu

_VMEM_LIMIT = 64 * 1024 * 1024  # fits v7x's 64 MiB/TC and is < v5e/v6e's 128 MiB


def _round_up(x, m):
    return (x + m - 1) // m * m


# ---------------------------------------------------------------------------
# Kernel 1: fused backbone GEMM (+bias, ReLU) + 1x1 classifier GEMM (+bias).
#   logits = relu(x @ w1 + b1) @ w2 + b2,  feat tile never leaves VMEM.
# ---------------------------------------------------------------------------
def _fused_backbone_cls_kernel(x_ref, w1_ref, b1_ref, w2_ref, b2_ref,
                               o_ref, acc_ref):
    k = pl.program_id(1)

    @pl.when(k == 0)
    def _():
        # bias folded into the accumulator init (free; no per-step broadcast)
        acc_ref[...] = jnp.zeros_like(acc_ref) + b1_ref[...].astype(jnp.float32)

    acc_ref[...] += jnp.dot(x_ref[...], w1_ref[...],
                            preferred_element_type=jnp.float32)

    @pl.when(k == pl.num_programs(1) - 1)
    def _():
        feat = jnp.maximum(acc_ref[...], 0.0).astype(w2_ref.dtype)
        logits = jnp.dot(feat, w2_ref[...], preferred_element_type=jnp.float32)
        logits = logits + b2_ref[...].astype(jnp.float32)
        o_ref[...] = logits.astype(o_ref.dtype)


def pallas_fused_backbone_classifier(patches, w1, b1, w2, b2, *,
                                     out_dtype=jnp.bfloat16,
                                     compute_dtype=jnp.bfloat16,
                                     tm=256, tk=512):
    M, K = patches.shape
    K2, Cf = w1.shape
    Cf2, NC = w2.shape
    assert K == K2 and Cf == Cf2
    assert b1.shape == (1, Cf) and b2.shape == (1, NC)

    Mp = _round_up(M, 8)
    Kp = _round_up(K, 128)
    Cfp = _round_up(Cf, 128)
    NCp = _round_up(NC, 128)
    tm = min(tm, Mp)
    tk = min(tk, Kp)
    Mp = _round_up(Mp, tm)
    Kp = _round_up(Kp, tk)

    xp = jnp.pad(patches.astype(compute_dtype), ((0, Mp - M), (0, Kp - K)))
    w1p = jnp.pad(w1.astype(compute_dtype), ((0, Kp - K), (0, Cfp - Cf)))
    b1p = jnp.pad(b1.astype(jnp.float32), ((0, 0), (0, Cfp - Cf)))
    w2p = jnp.pad(w2.astype(compute_dtype), ((0, Cfp - Cf), (0, NCp - NC)))
    b2p = jnp.pad(b2.astype(jnp.float32), ((0, 0), (0, NCp - NC)))

    out = pl.pallas_call(
        _fused_backbone_cls_kernel,
        out_shape=jax.ShapeDtypeStruct((Mp, NCp), out_dtype),
        grid_spec=pltpu.PrefetchScalarGridSpec(
            num_scalar_prefetch=0,
            grid=(Mp // tm, Kp // tk),
            in_specs=[
                pl.BlockSpec((tm, tk), lambda i, k: (i, k)),     # patches tile
                pl.BlockSpec((tk, Cfp), lambda i, k: (k, 0)),    # backbone W
                pl.BlockSpec((1, Cfp), lambda i, k: (0, 0)),     # backbone bias
                pl.BlockSpec((Cfp, NCp), lambda i, k: (0, 0)),   # classifier W
                pl.BlockSpec((1, NCp), lambda i, k: (0, 0)),     # classifier bias
            ],
            out_specs=pl.BlockSpec((tm, NCp), lambda i, k: (i, 0)),
            scratch_shapes=[pltpu.VMEM((tm, Cfp), jnp.float32)],
        ),
        compiler_params=pltpu.CompilerParams(
            dimension_semantics=("parallel", "arbitrary"),
            vmem_limit_bytes=_VMEM_LIMIT,
        ),
    )(xp, w1p, b1p, w2p, b2p)
    return out[:M, :NC]


# ---------------------------------------------------------------------------
# Kernel 2: fused separable bilinear upsample.
#   Per (n, class) slice:  out = Ah @ t @ Aw^T  (both matmuls in one kernel;
#   the [H, Wo] intermediate stays in VMEM/vregs, never hits HBM).
# ---------------------------------------------------------------------------
def _upsample_kernel(t_ref, ah_ref, awt_ref, o_ref):
    u = jnp.dot(ah_ref[...], t_ref[...], preferred_element_type=jnp.float32)
    o_ref[...] = jnp.dot(u.astype(awt_ref.dtype), awt_ref[...],
                         preferred_element_type=jnp.float32).astype(o_ref.dtype)


def pallas_bilinear_upsample(t, ah, awt, *, out_dtype=jnp.float32,
                             compute_dtype=jnp.bfloat16):
    """t: [B, Ho, Wo]; ah: [H, Ho]; awt: [Wo, W]  ->  [B, H, W]."""
    B, Ho, Wo = t.shape
    H, Ho2 = ah.shape
    Wo2, W = awt.shape
    assert Ho == Ho2 and Wo == Wo2

    Hop = _round_up(Ho, 8)      # contraction dim of the H-pass
    Wop = _round_up(Wo, 128)    # lane dim of t / contraction dim of the W-pass
    Hp = _round_up(H, 8)        # output sublane dim
    Wp = _round_up(W, 128)      # output lane dim (lane-dense stores)

    tp = jnp.pad(t.astype(compute_dtype),
                 ((0, 0), (0, Hop - Ho), (0, Wop - Wo)))
    ahp = jnp.pad(ah.astype(compute_dtype), ((0, Hp - H), (0, Hop - Ho)))
    awtp = jnp.pad(awt.astype(compute_dtype), ((0, Wop - Wo), (0, Wp - W)))

    out = pl.pallas_call(
        _upsample_kernel,
        out_shape=jax.ShapeDtypeStruct((B, Hp, Wp), out_dtype),
        grid_spec=pltpu.PrefetchScalarGridSpec(
            num_scalar_prefetch=0,
            grid=(B,),
            in_specs=[
                pl.BlockSpec((None, Hop, Wop), lambda b: (b, 0, 0)),  # logits slice
                pl.BlockSpec((Hp, Hop), lambda b: (0, 0)),            # Ah
                pl.BlockSpec((Wop, Wp), lambda b: (0, 0)),            # Aw^T
            ],
            out_specs=pl.BlockSpec((None, Hp, Wp), lambda b: (b, 0, 0)),
        ),
        compiler_params=pltpu.CompilerParams(
            dimension_semantics=("parallel",),
            vmem_limit_bytes=_VMEM_LIMIT,
        ),
    )(tp, ahp, awtp)
    return out[:, :H, :W]


# ---------------------------------------------------------------------------
# JAX glue: im2col for the 3x3 / stride-2 / pad-1 backbone conv (built in the
# compute dtype, bf16, to halve its HBM footprint).
# TODO(synk): replace the materialized im2col with 9 shifted in-kernel matmul
# taps (grid axis over (ky,kx)) to remove the 9x read amplification.
# ---------------------------------------------------------------------------
def _im2col_3x3_s2(x):
    N, C, H, W = x.shape
    Ho = (H + 2 - 3) // 2 + 1
    Wo = (W + 2 - 3) // 2 + 1
    xp = jnp.pad(x, ((0, 0), (0, 0), (1, 1), (1, 1)))
    cols = []
    for ky in range(3):
        for kx in range(3):
            cols.append(xp[:, :, ky:ky + 2 * (Ho - 1) + 1:2,
                              kx:kx + 2 * (Wo - 1) + 1:2])   # [N,C,Ho,Wo]
    patches = jnp.stack(cols, axis=2)                        # [N,C,9,Ho,Wo]
    patches = jnp.transpose(patches, (0, 3, 4, 1, 2))        # [N,Ho,Wo,C,9]
    return patches.reshape(N * Ho * Wo, C * 9), Ho, Wo


# ---------------------------------------------------------------------------
# JAX glue: 1-D bilinear interpolation matrix, PyTorch align_corners=False.
# ---------------------------------------------------------------------------
def _bilinear_matrix(in_size, out_size):
    scale = in_size / out_size
    dst = jnp.arange(out_size, dtype=jnp.float32)
    src = jnp.maximum((dst + 0.5) * scale - 0.5, 0.0)   # PyTorch clamps src >= 0
    i0 = jnp.clip(jnp.floor(src).astype(jnp.int32), 0, in_size - 1)
    i1 = jnp.minimum(i0 + 1, in_size - 1)
    lam = src - i0.astype(jnp.float32)
    A = jnp.zeros((out_size, in_size), jnp.float32)
    A = A.at[jnp.arange(out_size), i0].add(1.0 - lam)
    A = A.at[jnp.arange(out_size), i1].add(lam)
    return A


# ---------------------------------------------------------------------------
# Forward pass of _SimpleSegmentationModel (aux_classifier=None).
# ---------------------------------------------------------------------------
def simple_segmentation_forward(x, params, *, compute_dtype=jnp.bfloat16):
    N, Cin, H, W = x.shape
    Cfeat = params["backbone_w"].shape[0]
    nc = params["cls_w"].shape[0]

    # backbone (conv3x3/s2 + ReLU) fused with the 1x1 classifier
    patches, Ho, Wo = _im2col_3x3_s2(x.astype(compute_dtype))  # [N*Ho*Wo, Cin*9]
    w1 = params["backbone_w"].reshape(Cfeat, -1).T             # [Cin*9, Cfeat]
    b1 = params["backbone_b"][None, :]                         # [1, Cfeat]
    w2 = params["cls_w"].T                                     # [Cfeat, nc]
    b2 = params["cls_b"][None, :]                              # [1, nc]
    logits = pallas_fused_backbone_classifier(
        patches, w1, b1, w2, b2, compute_dtype=compute_dtype)  # [N*Ho*Wo, nc] bf16

    # low-res NHWC -> NCHW (cheap; only the low-resolution logits are moved),
    # then the fused separable bilinear upsample (align_corners=False).
    t = logits.reshape(N, Ho, Wo, nc)
    t = jnp.transpose(t, (0, 3, 1, 2)).reshape(N * nc, Ho, Wo)  # [N*nc, Ho, Wo]
    Ah = _bilinear_matrix(Ho, H)   # [H, Ho]
    Aw = _bilinear_matrix(Wo, W)   # [W, Wo]
    out = pallas_bilinear_upsample(t, Ah, Aw.T, out_dtype=jnp.float32,
                                   compute_dtype=compute_dtype)  # [N*nc, H, W]
    out = out.reshape(N, nc, H, W)

    # result['out']; forward() returns this tensor when aux_classifier is None.
    # TODO(synk): aux_classifier branch omitted (module is constructed with None here).
    return out


# ---------------------------------------------------------------------------
# Pure-JAX f32 reference (same math) for the in-script self-check.
# ---------------------------------------------------------------------------
def reference_forward(x, params):
    N, Cin, H, W = x.shape
    Cfeat = params["backbone_w"].shape[0]
    nc = params["cls_w"].shape[0]
    patches, Ho, Wo = _im2col_3x3_s2(x.astype(jnp.float32))
    w1 = params["backbone_w"].reshape(Cfeat, -1).T
    feat = jnp.maximum(patches @ w1 + params["backbone_b"][None, :], 0.0)
    logits = feat @ params["cls_w"].T + params["cls_b"][None, :]
    logits = logits.reshape(N, Ho, Wo, nc).transpose(0, 3, 1, 2)
    Ah = _bilinear_matrix(Ho, H)
    Aw = _bilinear_matrix(Wo, W)
    return jnp.einsum("hi,ncij,wj->nchw", Ah, logits, Aw)


if __name__ == "__main__":
    key = jax.random.PRNGKey(0)
    k_x, k_bw, k_bb, k_cw, k_cb = jax.random.split(key, 5)

    N, Cin, H, W = 2, 4, 16, 16
    Cfeat, num_classes = 8, 6

    x = jax.random.normal(k_x, (N, Cin, H, W), jnp.float32)
    params = {
        "backbone_w": 0.1 * jax.random.normal(k_bw, (Cfeat, Cin, 3, 3), jnp.float32),
        "backbone_b": 0.1 * jax.random.normal(k_bb, (Cfeat,), jnp.float32),
        "cls_w": 0.1 * jax.random.normal(k_cw, (num_classes, Cfeat), jnp.float32),
        "cls_b": 0.1 * jax.random.normal(k_cb, (num_classes,), jnp.float32),
    }

    out = jax.block_until_ready(simple_segmentation_forward(x, params))
    assert out.shape == (N, num_classes, H, W), out.shape
    assert out.dtype == jnp.float32

    ref = jax.block_until_ready(reference_forward(x, params))
    max_err = float(jnp.max(jnp.abs(out - ref)))
    assert max_err < 5e-2, f"max abs err vs f32 reference: {max_err}"
    print("KERNEL_OK")
</pallas_src>

<mosaic_0001>
module attributes {stable_mosaic.version = 11 : i64} {
  func.func @_fused_backbone_cls_kernel(%arg0: i32, %arg1: i32, %arg2: memref<128x128xbf16, #tpu.memory_space<vmem>>, %arg3: memref<128x128xbf16, #tpu.memory_space<vmem>>, %arg4: memref<1x128xf32, #tpu.memory_space<vmem>>, %arg5: memref<128x128xbf16, #tpu.memory_space<vmem>>, %arg6: memref<1x128xf32, #tpu.memory_space<vmem>>, %arg7: memref<128x128xbf16, #tpu.memory_space<vmem>>, %arg8: memref<128x128xf32, #tpu.memory_space<vmem>>) attributes {dimension_semantics = [#tpu.dimension_semantics<parallel>, #tpu.dimension_semantics<arbitrary>], iteration_bounds = array<i64: 1, 1>, scalar_prefetch = 0 : i64, scratch_operands = 1 : i64, tpu.core_type = #tpu.core_type<tc>, window_params = [{transform_indices = @transform_0, window_bounds = array<i64: 128, 128>}, {transform_indices = @transform_1, window_bounds = array<i64: 128, 128>}, {pipeline_mode = #tpu.pipeline_mode<synchronous>, transform_indices = @transform_2, window_bounds = array<i64: 1, 128>}, {pipeline_mode = #tpu.pipeline_mode<synchronous>, transform_indices = @transform_3, window_bounds = array<i64: 128, 128>}, {pipeline_mode = #tpu.pipeline_mode<synchronous>, transform_indices = @transform_4, window_bounds = array<i64: 1, 128>}, {transform_indices = @transform_5, window_bounds = array<i64: 128, 128>}]} {
    %c0_i32 = arith.constant 0 : i32
    %0 = arith.cmpi eq, %arg1, %c0_i32 : i32
    %1 = arith.extui %0 : i1 to i32
    %c0_i32_0 = arith.constant 0 : i32
    %2 = arith.cmpi ne, %1, %c0_i32_0 : i32
    scf.if %2 {
      %cst_10 = arith.constant 0.000000e+00 : f32
      %12 = vector.broadcast %cst_10 : f32 to vector<128x128xf32>
      %c0_11 = arith.constant 0 : index
      %c0_12 = arith.constant 0 : index
      %13 = vector.load %arg4[%c0_11, %c0_12] : memref<1x128xf32, #tpu.memory_space<vmem>>, vector<1x128xf32>
      %14 = vector.broadcast %13 : vector<1x128xf32> to vector<128x128xf32>
      %15 = arith.addf %12, %14 : vector<128x128xf32>
      %c0_13 = arith.constant 0 : index
      %c0_14 = arith.constant 0 : index
      %16 = vector.load %arg8[%c0_13, %c0_14] : memref<128x128xf32, #tpu.memory_space<vmem>>, vector<128x128xf32>
      tpu.vector_store %arg8[%c0_13, %c0_14], %15 {strides = array<i32>} : memref<128x128xf32, #tpu.memory_space<vmem>>, vector<128x128xf32>,
    } else {
    }
    %c0 = arith.constant 0 : index
    %c0_1 = arith.constant 0 : index
    %3 = vector.load %arg8[%c0, %c0_1] : memref<128x128xf32, #tpu.memory_space<vmem>>, vector<128x128xf32>
    %c0_2 = arith.constant 0 : index
    %c0_3 = arith.constant 0 : index
    %4 = vector.load %arg2[%c0_2, %c0_3] : memref<128x128xbf16, #tpu.memory_space<vmem>>, vector<128x128xbf16>
    %c0_4 = arith.constant 0 : index
    %c0_5 = arith.constant 0 : index
    %5 = vector.load %arg3[%c0_4, %c0_5] : memref<128x128xbf16, #tpu.memory_space<vmem>>, vector<128x128xbf16>
    %cst = arith.constant dense<0.000000e+00> : vector<128x128xf32>
    %6 = tpu.matmul %4, %5, %cst {dimension_numbers = #tpu.dot_dimension_numbers<[1], [0], [0], [1], [0, 0, 1, 1], [], []>} : vector<128x128xbf16>, vector<128x128xbf16>, vector<128x128xf32> -> vector<128x128xf32>
    %7 = arith.addf %3, %6 : vector<128x128xf32>
    %c0_6 = arith.constant 0 : index
    %c0_7 = arith.constant 0 : index
    %8 = vector.load %arg8[%c0_6, %c0_7] : memref<128x128xf32, #tpu.memory_space<vmem>>, vector<128x128xf32>
    tpu.vector_store %arg8[%c0_6, %c0_7], %7 {strides = array<i32>} : memref<128x128xf32, #tpu.memory_space<vmem>>, vector<128x128xf32>,
    %c0_i32_8 = arith.constant 0 : i32
    %9 = arith.cmpi eq, %arg1, %c0_i32_8 : i32
    %10 = arith.extui %9 : i1 to i32
    %c0_i32_9 = arith.constant 0 : i32
    %11 = arith.cmpi ne, %10, %c0_i32_9 : i32
    scf.if %11 {
      %c0_10 = arith.constant 0 : index
      %c0_11 = arith.constant 0 : index
      %12 = vector.load %arg8[%c0_10, %c0_11] : memref<128x128xf32, #tpu.memory_space<vmem>>, vector<128x128xf32>
      %cst_12 = arith.constant 0.000000e+00 : f32
      %13 = vector.broadcast %cst_12 : f32 to vector<128x128xf32>
      %14 = arith.maximumf %12, %13 : vector<128x128xf32>
      %15 = arith.truncf %14 : vector<128x128xf32> to vector<128x128xbf16>
      %c0_13 = arith.constant 0 : index
      %c0_14 = arith.constant 0 : index
      %16 = vector.load %arg5[%c0_13, %c0_14] : memref<128x128xbf16, #tpu.memory_space<vmem>>, vector<128x128xbf16>
      %cst_15 = arith.constant dense<0.000000e+00> : vector<128x128xf32>
      %17 = tpu.matmul %15, %16, %cst_15 {dimension_numbers = #tpu.dot_dimension_numbers<[1], [0], [0], [1], [0, 0, 1, 1], [], []>} : vector<128x128xbf16>, vector<128x128xbf16>, vector<128x128xf32> -> vector<128x128xf32>
      %c0_16 = arith.constant 0 : index
      %c0_17 = arith.constant 0 : index
      %18 = vector.load %arg6[%c0_16, %c0_17] : memref<1x128xf32, #tpu.memory_space<vmem>>, vector<1x128xf32>
      %19 = vector.broadcast %18 : vector<1x128xf32> to vector<128x128xf32>
      %20 = arith.addf %17, %19 : vector<128x128xf32>
      %21 = arith.truncf %20 : vector<128x128xf32> to vector<128x128xbf16>
      %c0_18 = arith.constant 0 : index
      %c0_19 = arith.constant 0 : index
      %22 = vector.load %arg7[%c0_18, %c0_19] : memref<128x128xbf16, #tpu.memory_space<vmem>>, vector<128x128xbf16>
      tpu.vector_store %arg7[%c0_18, %c0_19], %21 {strides = array<i32>} : memref<128x128xbf16, #tpu.memory_space<vmem>>, vector<128x128xbf16>,
    } else {
    }
    return
  }
  func.func @transform_0(%arg0: i32, %arg1: i32) -> (i32, i32) {
    %c0_i32 = arith.constant 0 : i32
    return %arg0, %arg1 : i32, i32
  }
  func.func @transform_1(%arg0: i32, %arg1: i32) -> (i32, i32) {
    %c0_i32 = arith.constant 0 : i32
    %c0_i32_0 = arith.constant 0 : i32
    return %arg1, %c0_i32 : i32, i32
  }
  func.func @transform_2(%arg0: i32, %arg1: i32) -> (i32, i32) {
    %c0_i32 = arith.constant 0 : i32
    %c0_i32_0 = arith.constant 0 : i32
    %c0_i32_1 = arith.constant 0 : i32
    return %c0_i32, %c0_i32_0 : i32, i32
  }
  func.func @transform_3(%arg0: i32, %arg1: i32) -> (i32, i32) {
    %c0_i32 = arith.constant 0 : i32
    %c0_i32_0 = arith.constant 0 : i32
    %c0_i32_1 = arith.constant 0 : i32
    return %c0_i32, %c0_i32_0 : i32, i32
  }
  func.func @transform_4(%arg0: i32, %arg1: i32) -> (i32, i32) {
    %c0_i32 = arith.constant 0 : i32
    %c0_i32_0 = arith.constant 0 : i32
    %c0_i32_1 = arith.constant 0 : i32
    return %c0_i32, %c0_i32_0 : i32, i32
  }
  func.func @transform_5(%arg0: i32, %arg1: i32) -> (i32, i32) {
    %c0_i32 = arith.constant 0 : i32
    %c0_i32_0 = arith.constant 0 : i32
    return %arg0, %c0_i32 : i32, i32
  }
}

</mosaic_0001>

<llo_original>
// kernel: tpu_custom_call.1
$region0: #{tpu_custom_call.1}
  #allocation0 [shape = 'u32[]', space=smem, size = 0x4, offset = 0x4, fixed_abs, tag = 'smem constant byte address 0x4 - core index']
  #allocation1 [shape = 'u32[144,128]{1,0:T(1,128)}', space=vmem, size = 0x12000, scoped, tag = 'internal scratch']
  #allocation2 [shape = 'f32[128,128]{1,0:T(8,128)}', space=vmem, size = 0x10000, scoped, tag = 'scratch operand']
  %s0 = inlined_call_operand.hbm [shape: bf16[128,128], index: 0, kind: input, shape index: {}]
  %s1 = inlined_call_operand.hbm [shape: bf16[128,128], index: 1, kind: input, shape index: {}]
  %s2 = inlined_call_operand.vmem [shape: f32[1,128], index: 2, kind: input, shape index: {}]
  %s3 = inlined_call_operand.hbm [shape: bf16[128,128], index: 3, kind: input, shape index: {}]
  %s4 = inlined_call_operand.vmem [shape: f32[1,128], index: 4, kind: input, shape index: {}]
  %s5 = inlined_call_operand.hbm [shape: bf16[128,128], index: 5, kind: output, shape index: {}]
  %s6 = sld [smem:[#allocation0]]
  $region50: #{tpu_custom_call.1} parent=0
    _
  %s8 = ssub.s32 1, %s6
  %s9 = scalar_select 0, %s8, %s6
  $region1: #{tpu_custom_call.1} parent=0
    #allocation3 [shape = 'u8[32768]{0}', space=vmem, size = 0x8000, scoped, tag = 'input window, operand 0, single buffered']
    #allocation4 [shape = 's32[1]{0}', space=sflag, size = 0x4, scoped, tag = 'scoped memory for tpu_custom_call.1']
    #allocation5 [shape = 's32[1]{0}', space=sflag, size = 0x4, scoped, tag = 'scoped memory for tpu_custom_call.1']
    #allocation6 [shape = 'u8[32768]{0}', space=vmem, size = 0x8000, scoped, tag = 'input window, operand 1, single buffered']
    #allocation7 [shape = 's32[1]{0}', space=sflag, size = 0x4, scoped, tag = 'scoped memory for tpu_custom_call.1']
    #allocation8 [shape = 'u8[32768]{0}', space=vmem, size = 0x8000, scoped, tag = 'input window, operand 3, single buffered']
    #allocation9 [shape = 'u8[32768]{0}', space=vmem, size = 0x8000, scoped, tag = 'output window, operand 0, single buffered']
    %10 = vsyncpa [#allocation4], 0
    %11 = vsyncpa [#allocation7], 0
    %12 = vsyncpa [#allocation5], 0
    // Predicated region
    $region2: #{tpu_custom_call.1} parent=1 // pred_check
      _
    $region3: #{tpu_custom_call.1} parent=1 // pred_check_branch
      %14 = sbr.rel (0) target = $region5
    $region4: #{tpu_custom_call.1} parent=1 // pred_region
      %s16 = ssub.s32 1024, 1024
      %17 = vsyncadd [#allocation4], %s16
      %s18 = sshll.u32 [#allocation3], 4
      %s19 = int_to_ptr.vmem [resolvable:$true] %s18
      %24 = dma.hbm_to_vmem [thread:$0]  %s0, 1024, %s19, [#allocation4], 64, 64, 4
    $region5: #{tpu_custom_call.1} parent=1 // pred_fallthru
      _
    // Predicated region
    $region6: #{tpu_custom_call.1} parent=1 // pred_check
      _
    $region7: #{tpu_custom_call.1} parent=1 // pred_check_branch
      %26 = sbr.rel (0) target = $region9
    $region8: #{tpu_custom_call.1} parent=1 // pred_region
      %s28 = ssub.s32 1024, 1024
      %29 = vsyncadd [#allocation7], %s28
      %s30 = sshll.u32 [#allocation6], 4
      %s31 = int_to_ptr.vmem [resolvable:$true] %s30
      %36 = dma.hbm_to_vmem [thread:$0]  %s1, 1024, %s31, [#allocation7], 64, 64, 4
    $region9: #{tpu_custom_call.1} parent=1 // pred_fallthru
      _
    // Predicated region
    $region10: #{tpu_custom_call.1} parent=1 // pred_check
      _
    $region11: #{tpu_custom_call.1} parent=1 // pred_check_branch
      %38 = sbr.rel (0) target = $region13
    $region12: #{tpu_custom_call.1} parent=1 // pred_region
      _
    $region13: #{tpu_custom_call.1} parent=1 // pred_fallthru
      _
    // Predicated region
    $region14: #{tpu_custom_call.1} parent=1 // pred_check
      _
    $region15: #{tpu_custom_call.1} parent=1 // pred_check_branch
      %40 = sbr.rel (0) target = $region17
    $region16: #{tpu_custom_call.1} parent=1 // pred_region
      %s42 = ssub.s32 1024, 1024
      %43 = vsyncadd [#allocation7], %s42
      %s44 = sshll.u32 [#allocation8], 4
      %s45 = int_to_ptr.vmem [resolvable:$true] %s44
      %50 = dma.hbm_to_vmem [thread:$0]  %s3, 1024, %s45, [#allocation7], 64, 64, 4
    $region17: #{tpu_custom_call.1} parent=1 // pred_fallthru
      _
    // Predicated region
    $region18: #{tpu_custom_call.1} parent=1 // pred_check
      _
    $region19: #{tpu_custom_call.1} parent=1 // pred_check_branch
      %52 = sbr.rel (0) target = $region21
    $region20: #{tpu_custom_call.1} parent=1 // pred_region
      _
    $region21: #{tpu_custom_call.1} parent=1 // pred_fallthru
      _
    // Predicated region
    $region22: #{tpu_custom_call.1} parent=1 // pred_check
      _
    $region23: #{tpu_custom_call.1} parent=1 // pred_check_branch
      %54 = sbr.rel (0) target = $region25
    $region24: #{tpu_custom_call.1} parent=1 // pred_region
      %55 = dma.done [#allocation4], 1024
    $region25: #{tpu_custom_call.1} parent=1 // pred_fallthru
      _
    // Predicated region
    $region26: #{tpu_custom_call.1} parent=1 // pred_check
      _
    $region27: #{tpu_custom_call.1} parent=1 // pred_check_branch
      %57 = sbr.rel (0) target = $region29
    $region28: #{tpu_custom_call.1} parent=1 // pred_region
      %58 = dma.done [#allocation7], 1024
    $region29: #{tpu_custom_call.1} parent=1 // pred_fallthru
      _
    // Predicated region
    $region30: #{tpu_custom_call.1} parent=1 // pred_check
      _
    $region31: #{tpu_custom_call.1} parent=1 // pred_check_branch
      %60 = sbr.rel (0) target = $region33
    $region32: #{tpu_custom_call.1} parent=1 // pred_region
      %61 = dma.done [#allocation7], 1024
    $region33: #{tpu_custom_call.1} parent=1 // pred_fallthru
      _
    %p63 = scmp.eq.s32.totalorder 0, 0
    // Predicated region
    $region34: #{tpu_custom_call.1} parent=1 // pred_check
      %p64 = pneg %p63
    $region35: #{tpu_custom_call.1} parent=1 // pred_check_branch
      %66 = sbr.rel (%p64) target = $region37
    $region36: #{tpu_custom_call.1} parent=1 // pred_region
      %v67 = vld [vmem:[%s2] sm:$0x1]
      %v69 = vlaneseq
      %v70 = vshrl.u32 %v69, 7
      %v71 = vsub.s32 0, %v70
      %v72 = vrot.slane %v67, %v71
      %v74 = vadd.f32 %v72, 0.0
      %75 = vst [vmem:[#allocation2] sm:$0xff] %v74
      %76 = vst [vmem:[#allocation2 + $0x8] sm:$0xff] %v74
      %77 = vst [vmem:[#allocation2 + $0x10] sm:$0xff] %v74
      %78 = vst [vmem:[#allocation2 + $0x18] sm:$0xff] %v74
      %79 = vst [vmem:[#allocation2 + $0x20] sm:$0xff] %v74
      %80 = vst [vmem:[#allocation2 + $0x28] sm:$0xff] %v74
      %81 = vst [vmem:[#allocation2 + $0x30] sm:$0xff] %v74
      %82 = vst [vmem:[#allocation2 + $0x38] sm:$0xff] %v74
      %83 = vst [vmem:[#allocation2 + $0x40] sm:$0xff] %v74
      %84 = vst [vmem:[#allocation2 + $0x48] sm:$0xff] %v74
      %85 = vst [vmem:[#allocation2 + $0x50] sm:$0xff] %v74
      %86 = vst [vmem:[#allocation2 + $0x58] sm:$0xff] %v74
      %87 = vst [vmem:[#allocation2 + $0x60] sm:$0xff] %v74
      %88 = vst [vmem:[#allocation2 + $0x68] sm:$0xff] %v74
      %89 = vst [vmem:[#allocation2 + $0x70] sm:$0xff] %v74
      %90 = vst [vmem:[#allocation2 + $0x78] sm:$0xff] %v74
    $region37: #{tpu_custom_call.1} parent=1 // pred_fallthru
      _
    %v91 = vld [vmem:[#allocation2] sm:$0xff]
    %v92 = vld [vmem:[#allocation2 + $0x8] sm:$0xff]
    %v93 = vld [vmem:[#allocation2 + $0x10] sm:$0xff]
    %v94 = vld [vmem:[#allocation2 + $0x18] sm:$0xff]
    %v95 = vld [vmem:[#allocation2 + $0x20] sm:$0xff]
    %v96 = vld [vmem:[#allocation2 + $0x28] sm:$0xff]
    %v97 = vld [vmem:[#allocation2 + $0x30] sm:$0xff]
    %v98 = vld [vmem:[#allocation2 + $0x38] sm:$0xff]
    %v99 = vld [vmem:[#allocation2 + $0x40] sm:$0xff]
    %v100 = vld [vmem:[#allocation2 + $0x48] sm:$0xff]
    %v101 = vld [vmem:[#allocation2 + $0x50] sm:$0xff]
    %v102 = vld [vmem:[#allocation2 + $0x58] sm:$0xff]
    %v103 = vld [vmem:[#allocation2 + $0x60] sm:$0xff]
    %v104 = vld [vmem:[#allocation2 + $0x68] sm:$0xff]
    %v105 = vld [vmem:[#allocation2 + $0x70] sm:$0xff]
    %v106 = vld [vmem:[#allocation2 + $0x78] sm:$0xff]
    %v107 = vld [vmem:[#allocation3] sm:$0xf]
    %v108 = vld [vmem:[#allocation3 + $0x4] sm:$0xf]
    %v109 = vld [vmem:[#allocation3 + $0x8] sm:$0xf]
    %v110 = vld [vmem:[#allocation3 + $0xc] sm:$0xf]
    %v111 = vld [vmem:[#allocation3 + $0x10] sm:$0xf]
    %v112 = vld [vmem:[#allocation3 + $0x14] sm:$0xf]
    %v113 = vld [vmem:[#allocation3 + $0x18] sm:$0xf]
    %v114 = vld [vmem:[#allocation3 + $0x1c] sm:$0xf]
    %v115 = vld [vmem:[#allocation3 + $0x20] sm:$0xf]
    %v116 = vld [vmem:[#allocation3 + $0x24] sm:$0xf]
    %v117 = vld [vmem:[#allocation3 + $0x28] sm:$0xf]
    %v118 = vld [vmem:[#allocation3 + $0x2c] sm:$0xf]
    %v119 = vld [vmem:[#allocation3 + $0x30] sm:$0xf]
    %v120 = vld [vmem:[#allocation3 + $0x34] sm:$0xf]
    %v121 = vld [vmem:[#allocation3 + $0x38] sm:$0xf]
    %v122 = vld [vmem:[#allocation3 + $0x3c] sm:$0xf]
    %v123 = vld [vmem:[#allocation6] sm:$0xf]
    %v124 = vld [vmem:[#allocation6 + $0x4] sm:$0xf]
    %v125 = vld [vmem:[#allocation6 + $0x8] sm:$0xf]
    %v126 = vld [vmem:[#allocation6 + $0xc] sm:$0xf]
    %v127 = vld [vmem:[#allocation6 + $0x10] sm:$0xf]
    %v128 = vld [vmem:[#allocation6 + $0x14] sm:$0xf]
    %v129 = vld [vmem:[#allocation6 + $0x18] sm:$0xf]
    %v130 = vld [vmem:[#allocation6 + $0x1c] sm:$0xf]
    %v131 = vld [vmem:[#allocation6 + $0x20] sm:$0xf]
    %v132 = vld [vmem:[#allocation6 + $0x24] sm:$0xf]
    %v133 = vld [vmem:[#allocation6 + $0x28] sm:$0xf]
    %v134 = vld [vmem:[#allocation6 + $0x2c] sm:$0xf]
    %v135 = vld [vmem:[#allocation6 + $0x30] sm:$0xf]
    %v136 = vld [vmem:[#allocation6 + $0x34] sm:$0xf]
    %v137 = vld [vmem:[#allocation6 + $0x38] sm:$0xf]
    %v138 = vld [vmem:[#allocation6 + $0x3c] sm:$0xf]
    %v155 = vunpack.c.l.b16 %v107
    %v156 = vunpack.c.l.b16 %v108
    %v157 = vunpack.c.l.b16 %v109
    %v158 = vunpack.c.l.b16 %v110
    %v159 = vunpack.c.l.b16 %v111
    %v160 = vunpack.c.l.b16 %v112
    %v161 = vunpack.c.l.b16 %v113
    %v162 = vunpack.c.l.b16 %v114
    %v163 = vunpack.c.l.b16 %v115
    %v164 = vunpack.c.l.b16 %v116
    %v165 = vunpack.c.l.b16 %v117
    %v166 = vunpack.c.l.b16 %v118
    %v167 = vunpack.c.l.b16 %v119
    %v168 = vunpack.c.l.b16 %v120
    %v169 = vunpack.c.l.b16 %v121
    %v170 = vunpack.c.l.b16 %v122
    %v171 = vpack.c.b16 %v156, %v155
    %v172 = vpack.c.b16 %v158, %v157
    %v173 = vpack.c.b16 %v160, %v159
    %v174 = vpack.c.b16 %v162, %v161
    %v175 = vpack.c.b16 %v164, %v163
    %v176 = vpack.c.b16 %v166, %v165
    %v177 = vpack.c.b16 %v168, %v167
    %v178 = vpack.c.b16 %v170, %v169
    %v203 = vunpack.c.l.b16 %v123
    %v204 = vunpack.c.l.b16 %v124
    %v205 = vunpack.c.l.b16 %v125
    %v206 = vunpack.c.l.b16 %v126
    %v207 = vunpack.c.l.b16 %v127
    %v208 = vunpack.c.l.b16 %v128
    %v209 = vunpack.c.l.b16 %v129
    %v210 = vunpack.c.l.b16 %v130
    %v211 = vunpack.c.l.b16 %v131
    %v212 = vunpack.c.l.b16 %v132
    %v213 = vunpack.c.l.b16 %v133
    %v214 = vunpack.c.l.b16 %v134
    %v215 = vunpack.c.l.b16 %v135
    %v216 = vunpack.c.l.b16 %v136
    %v217 = vunpack.c.l.b16 %v137
    %v218 = vunpack.c.l.b16 %v138
    %v219 = vpack.c.b16 %v204, %v203
    %v220 = vpack.c.b16 %v206, %v205
    %v221 = vpack.c.b16 %v208, %v207
    %v222 = vpack.c.b16 %v210, %v209
    %v223 = vpack.c.b16 %v212, %v211
    %v224 = vpack.c.b16 %v214, %v213
    %v225 = vpack.c.b16 %v216, %v215
    %v226 = vpack.c.b16 %v218, %v217
    %235 = vmatprep.subr.bf16.mxu0 0
    %236 = vmatpush1.bf16.msra.mxu0 %v226
    %237 = vmatprep.subr.bf16.mxu0 0
    %238 = vmatpush1.bf16.msra.mxu0 %v225
    %239 = vmatprep.subr.bf16.mxu0 0
    %240 = vmatpush1.bf16.msra.mxu0 %v224
    %241 = vmatprep.subr.bf16.mxu0 0
    %242 = vmatpush1.bf16.msra.mxu0 %v223
    %243 = vmatprep.subr.bf16.mxu0 0
    %244 = vmatpush1.bf16.msra.mxu0 %v222
    %245 = vmatprep.subr.bf16.mxu0 0
    %246 = vmatpush1.bf16.msra.mxu0 %v221
    %247 = vmatprep.subr.bf16.mxu0 0
    %248 = vmatpush1.bf16.msra.mxu0 %v220
    %249 = vmatprep.subr.bf16.mxu0 0
    %250 = vmatpush1.bf16.msra.mxu0 %v219
    %251 = vmatprep.subr.bf16.mxu0 0
    %252 = vmatpush2.bf16.msra.mxu0 0
    %253 = vmatprep.subr.bf16.mxu0 0
    %254 = vmatpush2.bf16.msra.mxu0 0
    %255 = vmatprep.subr.bf16.mxu0 0
    %256 = vmatpush2.bf16.msra.mxu0 0
    %257 = vmatprep.subr.bf16.mxu0 0
    %258 = vmatpush2.bf16.msra.mxu0 0
    %259 = vmatprep.subr.bf16.mxu0 0
    %260 = vmatpush2.bf16.msra.mxu0 0
    %261 = vmatprep.subr.bf16.mxu0 0
    %262 = vmatpush2.bf16.msra.mxu0 0
    %263 = vmatprep.subr.bf16.mxu0 0
    %264 = vmatpush2.bf16.msra.mxu0 0
    %265 = vmatprep.subr.bf16.mxu0 0
    %266 = vmatpush2.bf16.msra.mxu0 0
    %267 = vmatprep.mubr.bf16.mxu0 0
    %268 = vmatmul.mubr.bf16.gmra.mxu0 %v171
    %v269 = vpop.f32.mrf.mxu0
    %v270 = vadd.f32 0.0, %v269
    %v271 = vpop.f32.mrf.mxu0
    %v272 = vpop.f32.mrf.mxu0
    %v273 = vadd.f32 0.0, %v272
    %v274 = vpop.f32.mrf.mxu0
    %275 = vmatprep.mubr.bf16.mxu0 0
    %276 = vmatmul.mubr.bf16.gmra.mxu0 %v172
    %v277 = vpop.f32.mrf.mxu0
    %v278 = vadd.f32 0.0, %v277
    %v279 = vpop.f32.mrf.mxu0
    %v280 = vpop.f32.mrf.mxu0
    %v281 = vadd.f32 0.0, %v280
    %v282 = vpop.f32.mrf.mxu0
    %283 = vmatprep.mubr.bf16.mxu0 0
    %284 = vmatmul.mubr.bf16.gmra.mxu0 %v173
    %v285 = vpop.f32.mrf.mxu0
    %v286 = vadd.f32 0.0, %v285
    %v287 = vpop.f32.mrf.mxu0
    %v288 = vpop.f32.mrf.mxu0
    %v289 = vadd.f32 0.0, %v288
    %v290 = vpop.f32.mrf.mxu0
    %291 = vmatprep.mubr.bf16.mxu0 0
    %292 = vmatmul.mubr.bf16.gmra.mxu0 %v174
    %v293 = vpop.f32.mrf.mxu0
    %v294 = vadd.f32 0.0, %v293
    %v295 = vpop.f32.mrf.mxu0
    %v296 = vpop.f32.mrf.mxu0
    %v297 = vadd.f32 0.0, %v296
    %v298 = vpop.f32.mrf.mxu0
    %299 = vmatprep.mubr.bf16.mxu0 0
    %300 = vmatmul.mubr.bf16.gmra.mxu0 %v175
    %v301 = vpop.f32.mrf.mxu0
    %v302 = vadd.f32 0.0, %v301
    %v303 = vpop.f32.mrf.mxu0
    %v304 = vpop.f32.mrf.mxu0
    %v305 = vadd.f32 0.0, %v304
    %v306 = vpop.f32.mrf.mxu0
    %307 = vmatprep.mubr.bf16.mxu0 0
    %308 = vmatmul.mubr.bf16.gmra.mxu0 %v176
    %v309 = vpop.f32.mrf.mxu0
    %v310 = vadd.f32 0.0, %v309
    %v311 = vpop.f32.mrf.mxu0
    %v312 = vpop.f32.mrf.mxu0
    %v313 = vadd.f32 0.0, %v312
    %v314 = vpop.f32.mrf.mxu0
    %315 = vmatprep.mubr.bf16.mxu0 0
    %316 = vmatmul.mubr.bf16.gmra.mxu0 %v177
    %v317 = vpop.f32.mrf.mxu0
    %v318 = vadd.f32 0.0, %v317
    %v319 = vpop.f32.mrf.mxu0
    %v320 = vpop.f32.mrf.mxu0
    %v321 = vadd.f32 0.0, %v320
    %v322 = vpop.f32.mrf.mxu0
    %323 = vmatprep.mubr.bf16.mxu0 0
    %324 = vmatmul.mubr.bf16.gmra.mxu0 %v178
    %v325 = vpop.f32.mrf.mxu0
    %v326 = vadd.f32 0.0, %v325
    %v327 = vpop.f32.mrf.mxu0
    %v328 = vpop.f32.mrf.mxu0
    %v329 = vadd.f32 0.0, %v328
    %v330 = vpop.f32.mrf.mxu0
    %331 = vdwg.mxu0
    %v332 = vadd.f32 %v91, %v270
    %v333 = vadd.f32 %v92, %v273
    %v334 = vadd.f32 %v93, %v278
    %v335 = vadd.f32 %v94, %v281
    %v336 = vadd.f32 %v95, %v286
    %v337 = vadd.f32 %v96, %v289
    %v338 = vadd.f32 %v97, %v294
    %v339 = vadd.f32 %v98, %v297
    %v340 = vadd.f32 %v99, %v302
    %v341 = vadd.f32 %v100, %v305
    %v342 = vadd.f32 %v101, %v310
    %v343 = vadd.f32 %v102, %v313
    %v344 = vadd.f32 %v103, %v318
    %v345 = vadd.f32 %v104, %v321
    %v346 = vadd.f32 %v105, %v326
    %v347 = vadd.f32 %v106, %v329
    %348 = vst [vmem:[#allocation2] sm:$0xff] %v332
    %349 = vst [vmem:[#allocation2 + $0x8] sm:$0xff] %v333
    %350 = vst [vmem:[#allocation2 + $0x10] sm:$0xff] %v334
    %351 = vst [vmem:[#allocation2 + $0x18] sm:$0xff] %v335
    %352 = vst [vmem:[#allocation2 + $0x20] sm:$0xff] %v336
    %353 = vst [vmem:[#allocation2 + $0x28] sm:$0xff] %v337
    %354 = vst [vmem:[#allocation2 + $0x30] sm:$0xff] %v338
    %355 = vst [vmem:[#allocation2 + $0x38] sm:$0xff] %v339
    %356 = vst [vmem:[#allocation2 + $0x40] sm:$0xff] %v340
    %357 = vst [vmem:[#allocation2 + $0x48] sm:$0xff] %v341
    %358 = vst [vmem:[#allocation2 + $0x50] sm:$0xff] %v342
    %359 = vst [vmem:[#allocation2 + $0x58] sm:$0xff] %v343
    %360 = vst [vmem:[#allocation2 + $0x60] sm:$0xff] %v344
    %361 = vst [vmem:[#allocation2 + $0x68] sm:$0xff] %v345
    %362 = vst [vmem:[#allocation2 + $0x70] sm:$0xff] %v346
    %363 = vst [vmem:[#allocation2 + $0x78] sm:$0xff] %v347
    // Predicated region
    $region38: #{tpu_custom_call.1} parent=1 // pred_check
      %p364 = pneg %p63
    $region39: #{tpu_custom_call.1} parent=1 // pred_check_branch
      %366 = sbr.rel (%p364) target = $region41
    $region40: #{tpu_custom_call.1} parent=1 // pred_region
      %v367 = vld [vmem:[#allocation2] sm:$0xff]
      %v368 = vld [vmem:[#allocation2 + $0x8] sm:$0xff]
      %v369 = vld [vmem:[#allocation2 + $0x10] sm:$0xff]
      %v370 = vld [vmem:[#allocation2 + $0x18] sm:$0xff]
      %v371 = vld [vmem:[#allocation2 + $0x20] sm:$0xff]
      %v372 = vld [vmem:[#allocation2 + $0x28] sm:$0xff]
      %v373 = vld [vmem:[#allocation2 + $0x30] sm:$0xff]
      %v374 = vld [vmem:[#allocation2 + $0x38] sm:$0xff]
      %v375 = vld [vmem:[#allocation2 + $0x40] sm:$0xff]
      %v376 = vld [vmem:[#allocation2 + $0x48] sm:$0xff]
      %v377 = vld [vmem:[#allocation2 + $0x50] sm:$0xff]
      %v378 = vld [vmem:[#allocation2 + $0x58] sm:$0xff]
      %v379 = vld [vmem:[#allocation2 + $0x60] sm:$0xff]
      %v380 = vld [vmem:[#allocation2 + $0x68] sm:$0xff]
      %v381 = vld [vmem:[#allocation2 + $0x70] sm:$0xff]
      %v382 = vld [vmem:[#allocation2 + $0x78] sm:$0xff]
      %v383 = vmax.f32 %v367, 0.0
      %v384 = vmax.f32 %v368, 0.0
      %v385 = vmax.f32 %v369, 0.0
      %v386 = vmax.f32 %v370, 0.0
      %v387 = vmax.f32 %v371, 0.0
      %v388 = vmax.f32 %v372, 0.0
      %v389 = vmax.f32 %v373, 0.0
      %v390 = vmax.f32 %v374, 0.0
      %v391 = vmax.f32 %v375, 0.0
      %v392 = vmax.f32 %v376, 0.0
      %v393 = vmax.f32 %v377, 0.0
      %v394 = vmax.f32 %v378, 0.0
      %v395 = vmax.f32 %v379, 0.0
      %v396 = vmax.f32 %v380, 0.0
      %v397 = vmax.f32 %v381, 0.0
      %v398 = vmax.f32 %v382, 0.0
      %v399 = vpack.c.bf16 %v384, %v383
      %v400 = vpack.c.bf16 %v386, %v385
      %v401 = vpack.c.bf16 %v388, %v387
      %v402 = vpack.c.bf16 %v390, %v389
      %v403 = vpack.c.bf16 %v392, %v391
      %v404 = vpack.c.bf16 %v394, %v393
      %v405 = vpack.c.bf16 %v396, %v395
      %v406 = vpack.c.bf16 %v398, %v397
      %v407 = vld [vmem:[#allocation8] sm:$0xf]
      %v408 = vld [vmem:[#allocation8 + $0x4] sm:$0xf]
      %v409 = vld [vmem:[#allocation8 + $0x8] sm:$0xf]
      %v410 = vld [vmem:[#allocation8 + $0xc] sm:$0xf]
      %v411 = vld [vmem:[#allocation8 + $0x10] sm:$0xf]
      %v412 = vld [vmem:[#allocation8 + $0x14] sm:$0xf]
      %v413 = vld [vmem:[#allocation8 + $0x18] sm:$0xf]
      %v414 = vld [vmem:[#allocation8 + $0x1c] sm:$0xf]
      %v415 = vld [vmem:[#allocation8 + $0x20] sm:$0xf]
      %v416 = vld [vmem:[#allocation8 + $0x24] sm:$0xf]
      %v417 = vld [vmem:[#allocation8 + $0x28] sm:$0xf]
      %v418 = vld [vmem:[#allocation8 + $0x2c] sm:$0xf]
      %v419 = vld [vmem:[#allocation8 + $0x30] sm:$0xf]
      %v420 = vld [vmem:[#allocation8 + $0x34] sm:$0xf]
      %v421 = vld [vmem:[#allocation8 + $0x38] sm:$0xf]
      %v422 = vld [vmem:[#allocation8 + $0x3c] sm:$0xf]
      %v423 = vld [vmem:[%s4] sm:$0x1]
      %v425 = vlaneseq
      %v426 = vshrl.u32 %v425, 7
      %v427 = vsub.s32 0, %v426
      %v428 = vrot.slane %v423, %v427
      %v446 = vunpack.c.l.b16 %v407
      %v447 = vunpack.c.l.b16 %v408
      %v448 = vunpack.c.l.b16 %v409
      %v449 = vunpack.c.l.b16 %v410
      %v450 = vunpack.c.l.b16 %v411
      %v451 = vunpack.c.l.b16 %v412
      %v452 = vunpack.c.l.b16 %v413
      %v453 = vunpack.c.l.b16 %v414
      %v454 = vunpack.c.l.b16 %v415
      %v455 = vunpack.c.l.b16 %v416
      %v456 = vunpack.c.l.b16 %v417
      %v457 = vunpack.c.l.b16 %v418
      %v458 = vunpack.c.l.b16 %v419
      %v459 = vunpack.c.l.b16 %v420
      %v460 = vunpack.c.l.b16 %v421
      %v461 = vunpack.c.l.b16 %v422
      %v462 = vpack.c.b16 %v447, %v446
      %v463 = vpack.c.b16 %v449, %v448
      %v464 = vpack.c.b16 %v451, %v450
      %v465 = vpack.c.b16 %v453, %v452
      %v466 = vpack.c.b16 %v455, %v454
      %v467 = vpack.c.b16 %v457, %v456
      %v468 = vpack.c.b16 %v459, %v458
      %v469 = vpack.c.b16 %v461, %v460
      %478 = vmatprep.subr.bf16.mxu0 0
      %479 = vmatpush1.bf16.msra.mxu0 %v469
      %480 = vmatprep.subr.bf16.mxu0 0
      %481 = vmatpush1.bf16.msra.mxu0 %v468
      %482 = vmatprep.subr.bf16.mxu0 0
      %483 = vmatpush1.bf16.msra.mxu0 %v467
      %484 = vmatprep.subr.bf16.mxu0 0
      %485 = vmatpush1.bf16.msra.mxu0 %v466
      %486 = vmatprep.subr.bf16.mxu0 0
      %487 = vmatpush1.bf16.msra.mxu0 %v465
      %488 = vmatprep.subr.bf16.mxu0 0
      %489 = vmatpush1.bf16.msra.mxu0 %v464
      %490 = vmatprep.subr.bf16.mxu0 0
      %491 = vmatpush1.bf16.msra.mxu0 %v463
      %492 = vmatprep.subr.bf16.mxu0 0
      %493 = vmatpush1.bf16.msra.mxu0 %v462
      %494 = vmatprep.subr.bf16.mxu0 0
      %495 = vmatpush2.bf16.msra.mxu0 0
      %496 = vmatprep.subr.bf16.mxu0 0
      %497 = vmatpush2.bf16.msra.mxu0 0
      %498 = vmatprep.subr.bf16.mxu0 0
      %499 = vmatpush2.bf16.msra.mxu0 0
      %500 = vmatprep.subr.bf16.mxu0 0
      %501 = vmatpush2.bf16.msra.mxu0 0
      %502 = vmatprep.subr.bf16.mxu0 0
      %503 = vmatpush2.bf16.msra.mxu0 0
      %504 = vmatprep.subr.bf16.mxu0 0
      %505 = vmatpush2.bf16.msra.mxu0 0
      %506 = vmatprep.subr.bf16.mxu0 0
      %507 = vmatpush2.bf16.msra.mxu0 0
      %508 = vmatprep.subr.bf16.mxu0 0
      %509 = vmatpush2.bf16.msra.mxu0 0
      %510 = vmatprep.mubr.bf16.mxu0 0
      %511 = vmatmul.mubr.bf16.gmra.mxu0 %v399
      %v512 = vpop.f32.mrf.mxu0
      %v513 = vadd.f32 %v428, %v512
      %v514 = vpop.f32.mrf.mxu0
      %v515 = vpop.f32.mrf.mxu0
      %v516 = vadd.f32 %v428, %v515
      %v517 = vpop.f32.mrf.mxu0
      %518 = vmatprep.mubr.bf16.mxu0 0
      %519 = vmatmul.mubr.bf16.gmra.mxu0 %v400
      %v520 = vpop.f32.mrf.mxu0
      %v521 = vadd.f32 %v428, %v520
      %v522 = vpop.f32.mrf.mxu0
      %v523 = vpop.f32.mrf.mxu0
      %v524 = vadd.f32 %v428, %v523
      %v525 = vpop.f32.mrf.mxu0
      %526 = vmatprep.mubr.bf16.mxu0 0
      %527 = vmatmul.mubr.bf16.gmra.mxu0 %v401
      %v528 = vpop.f32.mrf.mxu0
      %v529 = vadd.f32 %v428, %v528
      %v530 = vpop.f32.mrf.mxu0
      %v531 = vpop.f32.mrf.mxu0
      %v532 = vadd.f32 %v428, %v531
      %v533 = vpop.f32.mrf.mxu0
      %534 = vmatprep.mubr.bf16.mxu0 0
      %535 = vmatmul.mubr.bf16.gmra.mxu0 %v402
      %v536 = vpop.f32.mrf.mxu0
      %v537 = vadd.f32 %v428, %v536
      %v538 = vpop.f32.mrf.mxu0
      %v539 = vpop.f32.mrf.mxu0
      %v540 = vadd.f32 %v428, %v539
      %v541 = vpop.f32.mrf.mxu0
      %542 = vmatprep.mubr.bf16.mxu0 0
      %543 = vmatmul.mubr.bf16.gmra.mxu0 %v403
      %v544 = vpop.f32.mrf.mxu0
      %v545 = vadd.f32 %v428, %v544
      %v546 = vpop.f32.mrf.mxu0
      %v547 = vpop.f32.mrf.mxu0
      %v548 = vadd.f32 %v428, %v547
      %v549 = vpop.f32.mrf.mxu0
      %550 = vmatprep.mubr.bf16.mxu0 0
      %551 = vmatmul.mubr.bf16.gmra.mxu0 %v404
      %v552 = vpop.f32.mrf.mxu0
      %v553 = vadd.f32 %v428, %v552
      %v554 = vpop.f32.mrf.mxu0
      %v555 = vpop.f32.mrf.mxu0
      %v556 = vadd.f32 %v428, %v555
      %v557 = vpop.f32.mrf.mxu0
      %558 = vmatprep.mubr.bf16.mxu0 0
      %559 = vmatmul.mubr.bf16.gmra.mxu0 %v405
      %v560 = vpop.f32.mrf.mxu0
      %v561 = vadd.f32 %v428, %v560
      %v562 = vpop.f32.mrf.mxu0
      %v563 = vpop.f32.mrf.mxu0
      %v564 = vadd.f32 %v428, %v563
      %v565 = vpop.f32.mrf.mxu0
      %566 = vmatprep.mubr.bf16.mxu0 0
      %567 = vmatmul.mubr.bf16.gmra.mxu0 %v406
      %v568 = vpop.f32.mrf.mxu0
      %v569 = vadd.f32 %v428, %v568
      %v570 = vpop.f32.mrf.mxu0
      %v571 = vpop.f32.mrf.mxu0
      %v572 = vadd.f32 %v428, %v571
      %v573 = vpop.f32.mrf.mxu0
      %574 = vdwg.mxu0
      %v575 = vpack.c.bf16 %v516, %v513
      %v576 = vpack.c.bf16 %v524, %v521
      %v577 = vpack.c.bf16 %v532, %v529
      %v578 = vpack.c.bf16 %v540, %v537
      %v579 = vpack.c.bf16 %v548, %v545
      %v580 = vpack.c.bf16 %v556, %v553
      %v581 = vpack.c.bf16 %v564, %v561
      %v582 = vpack.c.bf16 %v572, %v569
      %v591 = vunpack.c.l.b16 %v575
      %v592 = vunpack.c.h.b16 %v575
      %v593 = vunpack.c.l.b16 %v576
      %v594 = vunpack.c.h.b16 %v576
      %v595 = vunpack.c.l.b16 %v577
      %v596 = vunpack.c.h.b16 %v577
      %v597 = vunpack.c.l.b16 %v578
      %v598 = vunpack.c.h.b16 %v578
      %v599 = vunpack.c.l.b16 %v579
      %v600 = vunpack.c.h.b16 %v579
      %v601 = vunpack.c.l.b16 %v580
      %v602 = vunpack.c.h.b16 %v580
      %v603 = vunpack.c.l.b16 %v581
      %v604 = vunpack.c.h.b16 %v581
      %v605 = vunpack.c.l.b16 %v582
      %v606 = vunpack.c.h.b16 %v582
      %v607 = vpack.c.b16 %v591, %v591
      %v608 = vpack.c.b16 %v592, %v592
      %v609 = vpack.c.b16 %v593, %v593
      %v610 = vpack.c.b16 %v594, %v594
      %v611 = vpack.c.b16 %v595, %v595
      %v612 = vpack.c.b16 %v596, %v596
      %v613 = vpack.c.b16 %v597, %v597
      %v614 = vpack.c.b16 %v598, %v598
      %v615 = vpack.c.b16 %v599, %v599
      %v616 = vpack.c.b16 %v600, %v600
      %v617 = vpack.c.b16 %v601, %v601
      %v618 = vpack.c.b16 %v602, %v602
      %v619 = vpack.c.b16 %v603, %v603
      %v620 = vpack.c.b16 %v604, %v604
      %v621 = vpack.c.b16 %v605, %v605
      %v622 = vpack.c.b16 %v606, %v606
      %639 = vst [vmem:[#allocation9] sm:$0xf] %v607
      %640 = vst [vmem:[#allocation9 + $0x4] sm:$0xf] %v608
      %641 = vst [vmem:[#allocation9 + $0x8] sm:$0xf] %v609
      %642 = vst [vmem:[#allocation9 + $0xc] sm:$0xf] %v610
      %643 = vst [vmem:[#allocation9 + $0x10] sm:$0xf] %v611
      %644 = vst [vmem:[#allocation9 + $0x14] sm:$0xf] %v612
      %645 = vst [vmem:[#allocation9 + $0x18] sm:$0xf] %v613
      %646 = vst [vmem:[#allocation9 + $0x1c] sm:$0xf] %v614
      %647 = vst [vmem:[#allocation9 + $0x20] sm:$0xf] %v615
      %648 = vst [vmem:[#allocation9 + $0x24] sm:$0xf] %v616
      %649 = vst [vmem:[#allocation9 + $0x28] sm:$0xf] %v617
      %650 = vst [vmem:[#allocation9 + $0x2c] sm:$0xf] %v618
      %651 = vst [vmem:[#allocation9 + $0x30] sm:$0xf] %v619
      %652 = vst [vmem:[#allocation9 + $0x34] sm:$0xf] %v620
      %653 = vst [vmem:[#allocation9 + $0x38] sm:$0xf] %v621
      %654 = vst [vmem:[#allocation9 + $0x3c] sm:$0xf] %v622
    $region41: #{tpu_custom_call.1} parent=1 // pred_fallthru
      _
    // Predicated region
    $region42: #{tpu_custom_call.1} parent=1 // pred_check
      _
    $region43: #{tpu_custom_call.1} parent=1 // pred_check_branch
      %656 = sbr.rel (0) target = $region45
    $region44: #{tpu_custom_call.1} parent=1 // pred_region
      %s658 = ssub.s32 1024, 1024
      %659 = vsyncadd [#allocation5], %s658
      %s660 = sshll.u32 [#allocation9], 4
      %s661 = int_to_ptr.vmem [resolvable:$true] %s660
      %666 = dma.vmem_to_hbm [thread:$0]  %s661, 1024, %s5, [#allocation5], 64, 64, 4
    $region45: #{tpu_custom_call.1} parent=1 // pred_fallthru
      _
    // Predicated region
    $region46: #{tpu_custom_call.1} parent=1 // pred_check
      _
    $region47: #{tpu_custom_call.1} parent=1 // pred_check_branch
      %668 = sbr.rel (0) target = $region49
    $region48: #{tpu_custom_call.1} parent=1 // pred_region
      %669 = dma.done [#allocation5], 1024
    $region49: #{tpu_custom_call.1} parent=1 // pred_fallthru
      _
    %670 = vsyncpa [#allocation4], 1
    %671 = vsyncpa [#allocation7], 1
    %672 = vsyncpa [#allocation5], 1

</llo_original>
